<compile_context>
chip_gen: v7x
topology: tpu7x:2x2x1
jax: 0.10.0
libtpu: 0.0.40
codegen_flags: <defaults>
</compile_context>

<pallas_src>
import functools

import jax
import jax.numpy as jnp
from jax import lax
from jax.experimental import pallas as pl
from jax.experimental.pallas import tpu as pltpu

_NEG = -1e30          # padding value: exp(pad/eps - max) == 0 exactly


def _round_up(x, m):
    return ((x + m - 1) // m) * m


def _shoot_infs(x):
    """JAX equivalent of shoot_infs: zero the infs, then set them to max."""
    mask = jnp.isinf(x)
    xz = jnp.where(mask, 0.0, x)
    return jnp.where(mask, jnp.max(xz), xz)


def _vmem_budget_bytes():
    """Generation-aware usable-VMEM estimate (v5e/v6e 128 MiB, v7x 64 MiB)."""
    cap = 64 * 1024 * 1024
    try:
        info = pltpu.get_tpu_info()
        cap = int(getattr(info, "vmem_capacity_bytes", cap)) or cap
    except Exception:
        pass
    return int(cap * 3 // 4)          # leave headroom for the compiler


def _vmem_spec():
    return pl.BlockSpec(memory_space=pltpu.MemorySpace.VMEM)


# ------------------------- resident (whole problem in VMEM) ------------------
def _resident_kernel(*refs, inv_eps, num_iters, n_samples, k_valid, has_r):
    if has_r:
        x_ref, r_ref, out_ref = refs
        rr = r_ref[...].astype(jnp.float32)           # [1, Kp] target marginal
    else:
        x_ref, out_ref = refs
        rr = jnp.float32(1.0 / k_valid)               # uniform marginal
    Bp, Kp = out_ref.shape
    inv_b = jnp.float32(1.0 / n_samples)

    # P0 = exp(logits/eps - max) in (0, 1]  ->  no +inf possible, so torch's
    # shoot_infs right after the exp is dead and dropped.  P0 is staged in the
    # output window (saves a full [B,K] f32 VMEM temporary).
    q = x_ref[...].astype(jnp.float32) * jnp.float32(inv_eps)
    q = q - jnp.max(q)
    out_ref[...] = jnp.exp(q)

    col_ok = None
    if k_valid < Kp:                                  # lane-padded prototypes
        col_ok = lax.broadcasted_iota(jnp.int32, (1, Kp), 1) < k_valid

    # Diagonal-scaling Sinkhorn.  The initial global Q /= sum(Q) is a scalar
    # that cancels in the final output and is folded away.
    v = jnp.ones((1, Kp), jnp.float32)
    for it in range(num_iters):                       # static unroll
        p0 = out_ref[...]
        if it == 0:
            contrib = p0                              # sample scale a == 1
        else:
            rowdot = jnp.sum(p0 * v, axis=1, keepdims=True)     # [Bp, 1]
            a = inv_b * pl.reciprocal(rowdot, approx=False)
            contrib = a * p0
        marg = jnp.sum(contrib, axis=0, keepdims=True)          # [1, Kp]
        u = _shoot_infs(rr * pl.reciprocal(v * marg, approx=False))
        if col_ok is not None:
            u = jnp.where(col_ok, u, 0.0)             # padded lanes stay at 0
        v = v * u

    # Exact torch final step:  out[b,:] = P0[b,:] * v / dot(P0[b,:], v)
    pv = out_ref[...] * v
    rowdot = jnp.sum(pv, axis=1, keepdims=True)
    out_ref[...] = pv * pl.reciprocal(rowdot, approx=False)


def _sinkhorn_resident(x, r, *, inv_eps, num_iters, n_samples, k_valid,
                       vmem_limit):
    Bp, Kp = x.shape
    kern = functools.partial(
        _resident_kernel, inv_eps=inv_eps, num_iters=num_iters,
        n_samples=n_samples, k_valid=k_valid, has_r=r is not None)
    args = (x,) if r is None else (x, r)
    cost = pl.CostEstimate(
        flops=int((5 * num_iters + 6) * Bp * Kp),
        transcendentals=int(Bp * Kp),
        bytes_accessed=int(x.size * x.dtype.itemsize + Bp * Kp * 4))
    return pl.pallas_call(
        kern,
        out_shape=jax.ShapeDtypeStruct((Bp, Kp), jnp.float32),
        in_specs=[_vmem_spec()] * len(args),
        out_specs=_vmem_spec(),
        cost_estimate=cost,
        compiler_params=pltpu.CompilerParams(vmem_limit_bytes=vmem_limit),
    )(*args)


# ------------------------- streamed (B-tiled, multi-pass) --------------------
def _v_kernel(*refs, inv_eps, n_samples, k_valid, has_r):
    """grid = (num_iters, n_tiles): accumulate prototype marginal, update v."""
    if has_r:
        m_ref, x_ref, r_ref, v_ref, marg_ref = refs
        rr = r_ref[...].astype(jnp.float32)
    else:
        m_ref, x_ref, v_ref, marg_ref = refs
        rr = jnp.float32(1.0 / k_valid)
    it = pl.program_id(0)                 # Sinkhorn iteration (sequential)
    t = pl.program_id(1)                  # B tile (accumulated)
    n_t = pl.num_programs(1)
    Kp = v_ref.shape[1]
    inv_b = jnp.float32(1.0 / n_samples)

    @pl.when(jnp.logical_and(it == 0, t == 0))
    def _init_v():
        v_ref[...] = jnp.ones_like(v_ref)

    @pl.when(t == 0)
    def _init_marg():
        marg_ref[...] = jnp.zeros_like(marg_ref)

    # Recompute this tile's P0 from logits (same HBM read traffic as storing
    # P0, and the EUP exp hides under the input DMA).
    p0 = jnp.exp(x_ref[...].astype(jnp.float32) * jnp.float32(inv_eps)
                 - m_ref[...])
    v = v_ref[...]

    # Sample scale for this iteration: a = 1 on the first pass, otherwise the
    # previous iteration's column rescale  a = (1/B) / dot(P0[b,:], v).
    rowdot = jnp.sum(p0 * v, axis=1, keepdims=True)
    a = inv_b * pl.reciprocal(rowdot, approx=False)
    a = jnp.where(rowdot > 0.0, a, 0.0)   # zero-mass (padded) sample rows
    a = jnp.where(it == 0, 1.0, a)

    marg_ref[...] += jnp.sum(a * p0, axis=0, keepdims=True)      # [1, Kp]

    @pl.when(t == n_t - 1)                # marginal complete -> update v
    def _update_v():
        u = _shoot_infs(rr * pl.reciprocal(v_ref[...] * marg_ref[...],
                                           approx=False))
        if k_valid < Kp:
            col_ok = lax.broadcasted_iota(jnp.int32, (1, Kp), 1) < k_valid
            u = jnp.where(col_ok, u, 0.0)
        v_ref[...] = v_ref[...] * u


def _out_kernel(m_ref, x_ref, v_ref, out_ref, *, inv_eps):
    """Final pass: out[b,:] = P0[b,:] * v / dot(P0[b,:], v), per B tile."""
    p0 = jnp.exp(x_ref[...].astype(jnp.float32) * jnp.float32(inv_eps)
                 - m_ref[...])
    pv = p0 * v_ref[...]
    rowdot = jnp.sum(pv, axis=1, keepdims=True)
    out_ref[...] = pv * pl.reciprocal(rowdot, approx=False)


def _sinkhorn_streamed(x, m, r, *, inv_eps, num_iters, tb, n_samples, k_valid,
                       vmem_limit):
    Bp, Kp = x.shape
    n_t = Bp // tb
    has_r = r is not None

    if num_iters > 0:
        kern = functools.partial(_v_kernel, inv_eps=inv_eps,
                                 n_samples=n_samples, k_valid=k_valid,
                                 has_r=has_r)
        in_specs = [pl.BlockSpec((1, 1), lambda it, t: (0, 0)),
                    pl.BlockSpec((tb, Kp), lambda it, t: (t, 0))]
        args = [m, x]
        if has_r:
            in_specs.append(pl.BlockSpec((1, Kp), lambda it, t: (0, 0)))
            args.append(r)
        v = pl.pallas_call(
            kern,
            out_shape=jax.ShapeDtypeStruct((1, Kp), jnp.float32),
            grid=(num_iters, n_t),
            in_specs=in_specs,
            out_specs=pl.BlockSpec((1, Kp), lambda it, t: (0, 0)),
            scratch_shapes=[pltpu.VMEM((1, Kp), jnp.float32)],
            compiler_params=pltpu.CompilerParams(
                dimension_semantics=("arbitrary", "arbitrary"),
                vmem_limit_bytes=vmem_limit),
        )(*args)
    else:
        v = jnp.ones((1, Kp), jnp.float32)

    return pl.pallas_call(
        functools.partial(_out_kernel, inv_eps=inv_eps),
        out_shape=jax.ShapeDtypeStruct((Bp, Kp), jnp.float32),
        grid=(n_t,),
        in_specs=[pl.BlockSpec((1, 1), lambda t: (0, 0)),
                  pl.BlockSpec((tb, Kp), lambda t: (t, 0)),
                  pl.BlockSpec((1, Kp), lambda t: (0, 0))],
        out_specs=pl.BlockSpec((tb, Kp), lambda t: (t, 0)),
        compiler_params=pltpu.CompilerParams(
            dimension_semantics=("parallel",),    # both v7x TensorCores
            vmem_limit_bytes=vmem_limit),
    )(m, x, v)


# --------------- imb_factor > 1: prototype marginal pre-pass + r -------------
def _colsum_kernel(m_ref, x_ref, out_ref, *, inv_eps):
    @pl.when(pl.program_id(0) == 0)
    def _():
        out_ref[...] = jnp.zeros_like(out_ref)
    p0 = jnp.exp(x_ref[...].astype(jnp.float32) * jnp.float32(inv_eps)
                 - m_ref[...])
    out_ref[...] += jnp.sum(p0, axis=0, keepdims=True)


def _unnormalized_col_marginal(x, m, *, inv_eps, tb, vmem_limit):
    Bp, Kp = x.shape
    n_t = Bp // tb
    return pl.pallas_call(
        functools.partial(_colsum_kernel, inv_eps=inv_eps),
        out_shape=jax.ShapeDtypeStruct((1, Kp), jnp.float32),
        grid=(n_t,),
        in_specs=[pl.BlockSpec((1, 1), lambda t: (0, 0)),
                  pl.BlockSpec((tb, Kp), lambda t: (t, 0))],
        out_specs=pl.BlockSpec((1, Kp), lambda t: (0, 0)),
        compiler_params=pltpu.CompilerParams(
            dimension_semantics=("arbitrary",),
            vmem_limit_bytes=vmem_limit),
    )(m, x)


def _r_from_marginal(marg, *, n_samples, n_protos, imb_factor):
    # TODO(synk): the length-K argsort/sort has no clean Pallas equivalent;
    # it stays in plain JAX (only K elements, ordering is scale-invariant).
    order = jnp.argsort(marg)
    i = jnp.arange(n_protos, dtype=jnp.float32)
    r = (1.0 / imb_factor) ** (i / (n_protos - 1.0)) * (n_samples / n_protos)
    r = jnp.zeros((n_protos,), jnp.float32).at[order].set(jnp.sort(r))
    r = jnp.maximum(r, 1.0)
    return r / jnp.sum(r)


# --------------------------------- wrapper -----------------------------------
def sinkhorn_knopp(logits, *, epsilon=0.05, num_iters=3, imb_factor=1.0,
                   block_b=512, force_streamed=False):
    """Pallas forward pass of SinkhornKnopp: logits [B, K] -> float32 [B, K]."""
    B, K = logits.shape
    num_iters = int(num_iters)
    inv_eps = float(1.0 / epsilon)
    has_r = float(imb_factor) > 1.0

    x = logits
    # Lane-pad prototypes below one vreg width so output stores are dense.
    Kp = 128 if K < 128 else K
    if Kp != K:
        x = jnp.pad(x, ((0, 0), (0, Kp - K)), constant_values=_NEG)

    budget = _vmem_budget_bytes()
    itemsize = jnp.dtype(x.dtype).itemsize
    resident_bytes = (itemsize + 12) * B * Kp + (2 << 20)   # in + out/P0 + slack
    use_streamed = bool(force_streamed) or resident_bytes > budget

    Bp, tb = B, B
    if use_streamed:
        tb = _round_up(min(int(block_b), _round_up(B, 8)), 8)
        Bp = _round_up(B, tb)
        if Bp != B:
            x = jnp.pad(x, ((0, Bp - B), (0, 0)), constant_values=_NEG)

    m = None
    if use_streamed or has_r:
        # Global max of q = logits/eps (positive scale -> same maximiser).
        m = (jnp.max(x.astype(jnp.float32)) * jnp.float32(inv_eps)
             ).reshape(1, 1)

    r = None
    if has_r:
        marg = _unnormalized_col_marginal(
            x, m, inv_eps=inv_eps, tb=tb if use_streamed else Bp,
            vmem_limit=budget)[0, :K]
        r = _r_from_marginal(marg, n_samples=B, n_protos=K,
                             imb_factor=float(imb_factor))
        if Kp != K:   # padded lanes are masked to zero inside the kernels
            r = jnp.concatenate([r, jnp.full((Kp - K,), 1.0 / K, jnp.float32)])
        r = r.reshape(1, Kp)

    if use_streamed:
        out = _sinkhorn_streamed(x, m, r, inv_eps=inv_eps, num_iters=num_iters,
                                 tb=tb, n_samples=B, k_valid=K,
                                 vmem_limit=budget)
    else:
        out = _sinkhorn_resident(x, r, inv_eps=inv_eps, num_iters=num_iters,
                                 n_samples=B, k_valid=K, vmem_limit=budget)

    if Bp != B or Kp != K:
        out = out[:B, :K]
    return out


# ------------------------ pure-JAX reference (torch semantics) ---------------
def _reference(logits, epsilon, num_iters, imb_factor):
    q = logits.astype(jnp.float32) * jnp.float32(1.0 / epsilon)
    q = q - jnp.max(q)
    Q = jnp.exp(q).T                   # [K, B]
    Q = _shoot_infs(Q)
    Q = Q / jnp.sum(Q)
    K, B = Q.shape
    c = jnp.ones((B,), jnp.float32) / B
    if imb_factor > 1:
        order = jnp.argsort(jnp.sum(Q, axis=1))
        i = jnp.arange(K, dtype=jnp.float32)
        r = (1.0 / imb_factor) ** (i / (K - 1.0)) * (B / K)
        r = jnp.zeros((K,), jnp.float32).at[order].set(jnp.sort(r))
        r = jnp.maximum(r, 1.0)
        r = r / jnp.sum(r)
    else:
        r = jnp.ones((K,), jnp.float32) / K
    for _ in range(num_iters):
        u = jnp.sum(Q, axis=1)
        u = _shoot_infs(r / u)
        Q = Q * u[:, None]
        Q = Q * (c / jnp.sum(Q, axis=0))[None, :]
    return (Q / jnp.sum(Q, axis=0, keepdims=True)).T.astype(jnp.float32)


if __name__ == "__main__":
    key = jax.random.PRNGKey(0)
    k1, k2, k3, k4 = jax.random.split(key, 4)
    tol = dict(atol=2e-5, rtol=2e-5)

    # 1) balanced, resident path (args: num_iters_sk=3, epsilon_sk=0.05)
    B, K = 16, 128
    logits = jax.random.normal(k1, (B, K), dtype=jnp.float32)
    out = jax.block_until_ready(
        sinkhorn_knopp(logits, epsilon=0.05, num_iters=3, imb_factor=1.0))
    assert out.shape == (B, K) and out.dtype == jnp.float32
    assert jnp.allclose(out, _reference(logits, 0.05, 3, 1.0), **tol), \
        "balanced/resident mismatch"

    # 2) imbalanced (imb_factor > 1), resident path, K < 128 (lane padding + r)
    B2, K2 = 64, 32
    logits2 = jax.random.normal(k2, (B2, K2), dtype=jnp.float32)
    out2 = jax.block_until_ready(
        sinkhorn_knopp(logits2, epsilon=0.05, num_iters=3, imb_factor=3.0))
    assert out2.shape == (B2, K2) and out2.dtype == jnp.float32
    assert jnp.allclose(out2, _reference(logits2, 0.05, 3, 3.0), **tol), \
        "imbalanced/resident mismatch"

    # 3) balanced, streamed path forced (B tiled, row padding since 200 % 64 != 0)
    B3, K3 = 200, 384
    logits3 = jax.random.normal(k3, (B3, K3), dtype=jnp.float32)
    out3 = jax.block_until_ready(
        sinkhorn_knopp(logits3, epsilon=0.05, num_iters=3, imb_factor=1.0,
                       force_streamed=True, block_b=64))
    assert out3.shape == (B3, K3)
    assert jnp.allclose(out3, _reference(logits3, 0.05, 3, 1.0), **tol), \
        "balanced/streamed mismatch"

    # 4) imbalanced, streamed path forced (K not a multiple of 128)
    B4, K4 = 128, 160
    logits4 = jax.random.normal(k4, (B4, K4), dtype=jnp.float32)
    out4 = jax.block_until_ready(
        sinkhorn_knopp(logits4, epsilon=0.05, num_iters=3, imb_factor=2.0,
                       force_streamed=True, block_b=32))
    assert out4.shape == (B4, K4)
    assert jnp.allclose(out4, _reference(logits4, 0.05, 3, 2.0), **tol), \
        "imbalanced/streamed mismatch"

    print("KERNEL_OK")
</pallas_src>

<mosaic_0001>
module attributes {stable_mosaic.version = 11 : i64} {
  func.func @_resident_kernel(%arg0: memref<16x128xf32, #tpu.memory_space<vmem>>, %arg1: memref<16x128xf32, #tpu.memory_space<vmem>>) attributes {dimension_semantics = [], scalar_prefetch = 0 : i64, scratch_operands = 0 : i64, tpu.core_type = #tpu.core_type<tc>} {
    %c0 = arith.constant 0 : index
    %c0_0 = arith.constant 0 : index
    %0 = vector.load %arg0[%c0, %c0_0] : memref<16x128xf32, #tpu.memory_space<vmem>>, vector<16x128xf32>
    %cst = arith.constant 2.000000e+01 : f32
    %1 = vector.broadcast %cst : f32 to vector<16x128xf32>
    %2 = arith.mulf %0, %1 : vector<16x128xf32>
    %3 = vector.shape_cast %2 : vector<16x128xf32> to vector<1x16x128xf32>
    %cst_1 = arith.constant dense<0xFF800000> : vector<1xf32>
    %4 = vector.multi_reduction <maximumf>, %3, %cst_1 [1, 2] : vector<1x16x128xf32> to vector<1xf32>
    %5 = vector.shape_cast %4 : vector<1xf32> to vector<1x1x1xf32>
    %6 = vector.extract %5[0, 0, 0] : f32 from vector<1x1x1xf32>
    %7 = vector.broadcast %6 : f32 to vector<16x128xf32>
    %8 = arith.subf %2, %7 : vector<16x128xf32>
    %9 = math.exp %8 : vector<16x128xf32>
    %c0_2 = arith.constant 0 : index
    %c0_3 = arith.constant 0 : index
    %10 = vector.load %arg1[%c0_2, %c0_3] : memref<16x128xf32, #tpu.memory_space<vmem>>, vector<16x128xf32>
    tpu.vector_store %arg1[%c0_2, %c0_3], %9 {strides = array<i32>} : memref<16x128xf32, #tpu.memory_space<vmem>>, vector<16x128xf32>,
    %cst_4 = arith.constant 1.000000e+00 : f32
    %11 = vector.broadcast %cst_4 : f32 to vector<1x128xf32>
    %c0_5 = arith.constant 0 : index
    %c0_6 = arith.constant 0 : index
    %12 = vector.load %arg1[%c0_5, %c0_6] : memref<16x128xf32, #tpu.memory_space<vmem>>, vector<16x128xf32>
    %cst_7 = arith.constant dense<0.000000e+00> : vector<128xf32>
    %13 = vector.multi_reduction <add>, %12, %cst_7 [0] : vector<16x128xf32> to vector<128xf32>
    %14 = vector.shape_cast %13 : vector<128xf32> to vector<1x128xf32>
    %15 = arith.mulf %11, %14 : vector<1x128xf32>
    %16 = tpu.reciprocal %15 : vector<1x128xf32> -> vector<1x128xf32>
    %cst_8 = arith.constant 7.812500e-03 : f32
    %17 = vector.broadcast %cst_8 : f32 to vector<1x128xf32>
    %18 = arith.mulf %17, %16 : vector<1x128xf32>
    %19 = math.absf %18 : vector<1x128xf32>
    %cst_9 = arith.constant 0x7F800000 : f32
    %20 = vector.broadcast %cst_9 : f32 to vector<1x128xf32>
    %21 = arith.cmpf oeq, %19, %20 : vector<1x128xf32>
    %cst_10 = arith.constant 0.000000e+00 : f32
    %22 = vector.broadcast %cst_10 : f32 to vector<1x128xf32>
    %23 = arith.select %21, %22, %18 : vector<1x128xi1>, vector<1x128xf32>
    %24 = vector.shape_cast %23 : vector<1x128xf32> to vector<1x1x128xf32>
    %cst_11 = arith.constant dense<0xFF800000> : vector<1xf32>
    %25 = vector.multi_reduction <maximumf>, %24, %cst_11 [1, 2] : vector<1x1x128xf32> to vector<1xf32>
    %26 = vector.shape_cast %25 : vector<1xf32> to vector<1x1x1xf32>
    %27 = vector.extract %26[0, 0, 0] : f32 from vector<1x1x1xf32>
    %28 = vector.broadcast %27 : f32 to vector<1x128xf32>
    %29 = arith.select %21, %28, %23 : vector<1x128xi1>, vector<1x128xf32>
    %30 = arith.mulf %11, %29 : vector<1x128xf32>
    %c0_12 = arith.constant 0 : index
    %c0_13 = arith.constant 0 : index
    %31 = vector.load %arg1[%c0_12, %c0_13] : memref<16x128xf32, #tpu.memory_space<vmem>>, vector<16x128xf32>
    %32 = vector.broadcast %30 : vector<1x128xf32> to vector<16x128xf32>
    %33 = arith.mulf %31, %32 : vector<16x128xf32>
    %cst_14 = arith.constant dense<0.000000e+00> : vector<16xf32>
    %34 = vector.multi_reduction <add>, %33, %cst_14 [1] : vector<16x128xf32> to vector<16xf32>
    %35 = vector.shape_cast %34 : vector<16xf32> to vector<16x1xf32>
    %36 = tpu.reciprocal %35 : vector<16x1xf32> -> vector<16x1xf32>
    %cst_15 = arith.constant 6.250000e-02 : f32
    %37 = vector.broadcast %cst_15 : f32 to vector<16x1xf32>
    %38 = arith.mulf %37, %36 : vector<16x1xf32>
    %39 = vector.broadcast %38 : vector<16x1xf32> to vector<16x128xf32>
    %40 = arith.mulf %39, %31 : vector<16x128xf32>
    %cst_16 = arith.constant dense<0.000000e+00> : vector<128xf32>
    %41 = vector.multi_reduction <add>, %40, %cst_16 [0] : vector<16x128xf32> to vector<128xf32>
    %42 = vector.shape_cast %41 : vector<128xf32> to vector<1x128xf32>
    %43 = arith.mulf %30, %42 : vector<1x128xf32>
    %44 = tpu.reciprocal %43 : vector<1x128xf32> -> vector<1x128xf32>
    %cst_17 = arith.constant 7.812500e-03 : f32
    %45 = vector.broadcast %cst_17 : f32 to vector<1x128xf32>
    %46 = arith.mulf %45, %44 : vector<1x128xf32>
    %47 = math.absf %46 : vector<1x128xf32>
    %cst_18 = arith.constant 0x7F800000 : f32
    %48 = vector.broadcast %cst_18 : f32 to vector<1x128xf32>
    %49 = arith.cmpf oeq, %47, %48 : vector<1x128xf32>
    %cst_19 = arith.constant 0.000000e+00 : f32
    %50 = vector.broadcast %cst_19 : f32 to vector<1x128xf32>
    %51 = arith.select %49, %50, %46 : vector<1x128xi1>, vector<1x128xf32>
    %52 = vector.shape_cast %51 : vector<1x128xf32> to vector<1x1x128xf32>
    %cst_20 = arith.constant dense<0xFF800000> : vector<1xf32>
    %53 = vector.multi_reduction <maximumf>, %52, %cst_20 [1, 2] : vector<1x1x128xf32> to vector<1xf32>
    %54 = vector.shape_cast %53 : vector<1xf32> to vector<1x1x1xf32>
    %55 = vector.extract %54[0, 0, 0] : f32 from vector<1x1x1xf32>
    %56 = vector.broadcast %55 : f32 to vector<1x128xf32>
    %57 = arith.select %49, %56, %51 : vector<1x128xi1>, vector<1x128xf32>
    %58 = arith.mulf %30, %57 : vector<1x128xf32>
    %c0_21 = arith.constant 0 : index
    %c0_22 = arith.constant 0 : index
    %59 = vector.load %arg1[%c0_21, %c0_22] : memref<16x128xf32, #tpu.memory_space<vmem>>, vector<16x128xf32>
    %60 = vector.broadcast %58 : vector<1x128xf32> to vector<16x128xf32>
    %61 = arith.mulf %59, %60 : vector<16x128xf32>
    %cst_23 = arith.constant dense<0.000000e+00> : vector<16xf32>
    %62 = vector.multi_reduction <add>, %61, %cst_23 [1] : vector<16x128xf32> to vector<16xf32>
    %63 = vector.shape_cast %62 : vector<16xf32> to vector<16x1xf32>
    %64 = tpu.reciprocal %63 : vector<16x1xf32> -> vector<16x1xf32>
    %cst_24 = arith.constant 6.250000e-02 : f32
    %65 = vector.broadcast %cst_24 : f32 to vector<16x1xf32>
    %66 = arith.mulf %65, %64 : vector<16x1xf32>
    %67 = vector.broadcast %66 : vector<16x1xf32> to vector<16x128xf32>
    %68 = arith.mulf %67, %59 : vector<16x128xf32>
    %cst_25 = arith.constant dense<0.000000e+00> : vector<128xf32>
    %69 = vector.multi_reduction <add>, %68, %cst_25 [0] : vector<16x128xf32> to vector<128xf32>
    %70 = vector.shape_cast %69 : vector<128xf32> to vector<1x128xf32>
    %71 = arith.mulf %58, %70 : vector<1x128xf32>
    %72 = tpu.reciprocal %71 : vector<1x128xf32> -> vector<1x128xf32>
    %cst_26 = arith.constant 7.812500e-03 : f32
    %73 = vector.broadcast %cst_26 : f32 to vector<1x128xf32>
    %74 = arith.mulf %73, %72 : vector<1x128xf32>
    %75 = math.absf %74 : vector<1x128xf32>
    %cst_27 = arith.constant 0x7F800000 : f32
    %76 = vector.broadcast %cst_27 : f32 to vector<1x128xf32>
    %77 = arith.cmpf oeq, %75, %76 : vector<1x128xf32>
    %cst_28 = arith.constant 0.000000e+00 : f32
    %78 = vector.broadcast %cst_28 : f32 to vector<1x128xf32>
    %79 = arith.select %77, %78, %74 : vector<1x128xi1>, vector<1x128xf32>
    %80 = vector.shape_cast %79 : vector<1x128xf32> to vector<1x1x128xf32>
    %cst_29 = arith.constant dense<0xFF800000> : vector<1xf32>
    %81 = vector.multi_reduction <maximumf>, %80, %cst_29 [1, 2] : vector<1x1x128xf32> to vector<1xf32>
    %82 = vector.shape_cast %81 : vector<1xf32> to vector<1x1x1xf32>
    %83 = vector.extract %82[0, 0, 0] : f32 from vector<1x1x1xf32>
    %84 = vector.broadcast %83 : f32 to vector<1x128xf32>
    %85 = arith.select %77, %84, %79 : vector<1x128xi1>, vector<1x128xf32>
    %86 = arith.mulf %58, %85 : vector<1x128xf32>
    %c0_30 = arith.constant 0 : index
    %c0_31 = arith.constant 0 : index
    %87 = vector.load %arg1[%c0_30, %c0_31] : memref<16x128xf32, #tpu.memory_space<vmem>>, vector<16x128xf32>
    %88 = vector.broadcast %86 : vector<1x128xf32> to vector<16x128xf32>
    %89 = arith.mulf %87, %88 : vector<16x128xf32>
    %cst_32 = arith.constant dense<0.000000e+00> : vector<16xf32>
    %90 = vector.multi_reduction <add>, %89, %cst_32 [1] : vector<16x128xf32> to vector<16xf32>
    %91 = vector.shape_cast %90 : vector<16xf32> to vector<16x1xf32>
    %92 = tpu.reciprocal %91 : vector<16x1xf32> -> vector<16x1xf32>
    %93 = vector.broadcast %92 : vector<16x1xf32> to vector<16x128xf32>
    %94 = arith.mulf %89, %93 : vector<16x128xf32>
    %c0_33 = arith.constant 0 : index
    %c0_34 = arith.constant 0 : index
    %95 = vector.load %arg1[%c0_33, %c0_34] : memref<16x128xf32, #tpu.memory_space<vmem>>, vector<16x128xf32>
    tpu.vector_store %arg1[%c0_33, %c0_34], %94 {strides = array<i32>} : memref<16x128xf32, #tpu.memory_space<vmem>>, vector<16x128xf32>,
    return
  }
}

</mosaic_0001>

<llo_original>
// kernel: tpu_custom_call.1
$region0: #{tpu_custom_call.1}
  #allocation0 [shape = 'u32[]', space=smem, size = 0x4, offset = 0x4, fixed_abs, tag = 'smem constant byte address 0x4 - core index']
  #allocation1 [shape = 'u32[144,128]{1,0:T(1,128)}', space=vmem, size = 0x12000, scoped, tag = 'internal scratch']
  %s0 = inlined_call_operand.hbm [shape: f32[16,128], index: 0, kind: input, shape index: {}]
  %s1 = inlined_call_operand.hbm [shape: f32[16,128], index: 1, kind: output, shape index: {}]
  %s2 = sld [smem:[#allocation0]]
  $region18: #{tpu_custom_call.1} parent=0
    _
  %s4 = ssub.s32 1, %s2
  %s5 = scalar_select 0, %s4, %s2
  $region1: #{tpu_custom_call.1} parent=0
    #allocation2 [shape = 'u8[8192]{0}', space=vmem, size = 0x2000, scoped, tag = 'input window, operand 0, single buffered']
    #allocation3 [shape = 's32[1]{0}', space=sflag, size = 0x4, scoped, tag = 'scoped memory for tpu_custom_call.1']
    #allocation4 [shape = 's32[1]{0}', space=sflag, size = 0x4, scoped, tag = 'scoped memory for tpu_custom_call.1']
    #allocation5 [shape = 'u8[8192]{0}', space=vmem, size = 0x2000, scoped, tag = 'output window, operand 0, single buffered']
    %6 = vsyncpa [#allocation3], 0
    %7 = vsyncpa [#allocation4], 0
    // Predicated region
    $region2: #{tpu_custom_call.1} parent=1 // pred_check
      _
    $region3: #{tpu_custom_call.1} parent=1 // pred_check_branch
      %9 = sbr.rel (0) target = $region5
    $region4: #{tpu_custom_call.1} parent=1 // pred_region
      %s11 = ssub.s32 256, 256
      %12 = vsyncadd [#allocation3], %s11
      %s13 = sshll.u32 [#allocation2], 4
      %s14 = int_to_ptr.vmem [resolvable:$true] %s13
      %19 = dma.hbm_to_vmem [thread:$0]  %s0, 256, %s14, [#allocation3], 128, 128, 8
    $region5: #{tpu_custom_call.1} parent=1 // pred_fallthru
      _
    // Predicated region
    $region6: #{tpu_custom_call.1} parent=1 // pred_check
      _
    $region7: #{tpu_custom_call.1} parent=1 // pred_check_branch
      %21 = sbr.rel (0) target = $region9
    $region8: #{tpu_custom_call.1} parent=1 // pred_region
      %22 = dma.done [#allocation3], 256
    $region9: #{tpu_custom_call.1} parent=1 // pred_fallthru
      _
    %v23 = vld [vmem:[#allocation2] sm:$0xff]
    %v24 = vld [vmem:[#allocation2 + $0x8] sm:$0xff]
    %v25 = vmul.f32 %v23, 20.0
    %v26 = vmul.f32 %v24, 20.0
    %v27 = vmax.f32 %v25, %v26
    %28 = vmax.xlane.f32.xlu0 %v27
    %v29 = vpop.xlane.xlu0 %28
    %v30 = vrot.slane %v29, 4
    %v31 = vmax.f32 %v29, %v30
    %v32 = vrot.slane %v31, 2
    %v33 = vmax.f32 %v31, %v32
    %v34 = vrot.slane %v33, 1
    %v35 = vmax.f32 %v33, %v34
    %s36 = vtos %v35
    %v37 = vstv %s36
    %v38 = vsub.f32 %v25, %v37
    %v39 = vsub.f32 %v26, %v37
    %v40 = vmul.f32 %v38, 1.442695
    %v41 = vpow.pop %v40
    %v42 = vmul.f32 %v39, 1.442695
    %v43 = vpow.pop %v42
    %44 = vst [vmem:[#allocation5] sm:$0xff] %v41
    %45 = vst [vmem:[#allocation5 + $0x8] sm:$0xff] %v43
    %v46 = vld [vmem:[#allocation5] sm:$0xff]
    %v47 = vld [vmem:[#allocation5 + $0x8] sm:$0xff]
    %v48 = vadd.f32 %v46, %v47
    %v49 = vrot.slane %v48, 4
    %v50 = vadd.f32 %v48, %v49
    %v51 = vrot.slane %v50, 2
    %v52 = vadd.f32 %v50, %v51
    %v53 = vrot.slane %v52, 1
    %v54 = vadd.f32 %v52, %v53
    %v55 = vrcp.pop %v54
    %v56 = vmul.f32 %v55, 0.0078125
    %v57 = vand.u32 2147483647, %v56
    %vm58 = vcmp.eq.f32.partialorder %v57, inf
    %v59 = vsel %vm58, 0.0, %v56
    %60 = vmax.xlane.f32.xlu0 %v59
    %v61 = vpop.xlane.xlu0 %60
    %s62 = vtos %v61
    %v63 = vstv %s62
    %v64 = vsel %vm58, %v63, %v56
    %v65 = vmul.f32 %v46, %v64
    %v66 = vmul.f32 %v47, %v64
    %67 = vadd.xlane.f32.xlu0 %v65
    %v68 = vpop.xlane.xlu0 %67
    %69 = vadd.xlane.f32.xlu0 %v66
    %v70 = vpop.xlane.xlu0 %69
    %v71 = vrcp.pop %v68
    %v72 = vrcp.pop %v70
    %v73 = vmul.f32 %v71, 0.0625
    %v74 = vmul.f32 %v72, 0.0625
    %v75 = vmul.f32 %v73, %v46
    %v76 = vmul.f32 %v74, %v47
    %v77 = vadd.f32 %v75, %v76
    %v78 = vrot.slane %v77, 4
    %v79 = vadd.f32 %v77, %v78
    %v80 = vrot.slane %v79, 2
    %v81 = vadd.f32 %v79, %v80
    %v82 = vrot.slane %v81, 1
    %v83 = vadd.f32 %v81, %v82
    %v84 = vmul.f32 %v64, %v83
    %v85 = vrcp.pop %v84
    %v86 = vmul.f32 %v85, 0.0078125
    %v87 = vand.u32 2147483647, %v86
    %vm88 = vcmp.eq.f32.partialorder %v87, inf
    %v89 = vsel %vm88, 0.0, %v86
    %90 = vmax.xlane.f32.xlu0 %v89
    %v91 = vpop.xlane.xlu0 %90
    %s92 = vtos %v91
    %v93 = vstv %s92
    %v94 = vsel %vm88, %v93, %v86
    %v95 = vmul.f32 %v64, %v94
    %v96 = vmul.f32 %v46, %v95
    %v97 = vmul.f32 %v47, %v95
    %98 = vadd.xlane.f32.xlu0 %v96
    %v99 = vpop.xlane.xlu0 %98
    %100 = vadd.xlane.f32.xlu0 %v97
    %v101 = vpop.xlane.xlu0 %100
    %v102 = vrcp.pop %v99
    %v103 = vrcp.pop %v101
    %v104 = vmul.f32 %v102, 0.0625
    %v105 = vmul.f32 %v103, 0.0625
    %v106 = vmul.f32 %v104, %v46
    %v107 = vmul.f32 %v105, %v47
    %v108 = vadd.f32 %v106, %v107
    %v109 = vrot.slane %v108, 4
    %v110 = vadd.f32 %v108, %v109
    %v111 = vrot.slane %v110, 2
    %v112 = vadd.f32 %v110, %v111
    %v113 = vrot.slane %v112, 1
    %v114 = vadd.f32 %v112, %v113
    %v115 = vmul.f32 %v95, %v114
    %v116 = vrcp.pop %v115
    %v117 = vmul.f32 %v116, 0.0078125
    %v118 = vand.u32 2147483647, %v117
    %vm119 = vcmp.eq.f32.partialorder %v118, inf
    %v120 = vsel %vm119, 0.0, %v117
    %121 = vmax.xlane.f32.xlu0 %v120
    %v122 = vpop.xlane.xlu0 %121
    %s123 = vtos %v122
    %v124 = vstv %s123
    %v125 = vsel %vm119, %v124, %v117
    %v126 = vmul.f32 %v95, %v125
    %v127 = vmul.f32 %v46, %v126
    %v128 = vmul.f32 %v47, %v126
    %129 = vadd.xlane.f32.xlu0 %v127
    %v130 = vpop.xlane.xlu0 %129
    %131 = vadd.xlane.f32.xlu0 %v128
    %v132 = vpop.xlane.xlu0 %131
    %v133 = vrcp.pop %v130
    %v134 = vrcp.pop %v132
    %v135 = vmul.f32 %v127, %v133
    %v136 = vmul.f32 %v128, %v134
    %137 = vst [vmem:[#allocation5] sm:$0xff] %v135
    %138 = vst [vmem:[#allocation5 + $0x8] sm:$0xff] %v136
    // Predicated region
    $region10: #{tpu_custom_call.1} parent=1 // pred_check
      _
    $region11: #{tpu_custom_call.1} parent=1 // pred_check_branch
      %140 = sbr.rel (0) target = $region13
    $region12: #{tpu_custom_call.1} parent=1 // pred_region
      %s142 = ssub.s32 256, 256
      %143 = vsyncadd [#allocation4], %s142
      %s144 = sshll.u32 [#allocation5], 4
      %s145 = int_to_ptr.vmem [resolvable:$true] %s144
      %150 = dma.vmem_to_hbm [thread:$0]  %s145, 256, %s1, [#allocation4], 128, 128, 8
    $region13: #{tpu_custom_call.1} parent=1 // pred_fallthru
      _
    // Predicated region
    $region14: #{tpu_custom_call.1} parent=1 // pred_check
      _
    $region15: #{tpu_custom_call.1} parent=1 // pred_check_branch
      %152 = sbr.rel (0) target = $region17
    $region16: #{tpu_custom_call.1} parent=1 // pred_region
      %153 = dma.done [#allocation4], 256
    $region17: #{tpu_custom_call.1} parent=1 // pred_fallthru
      _
    %154 = vsyncpa [#allocation3], 1
    %155 = vsyncpa [#allocation4], 1

</llo_original>
